<compile_context>
chip_gen: v6e
topology: v6e:2x2x1
jax: 0.10.0
libtpu: 0.0.40
codegen_flags: <defaults>
</compile_context>

<pallas_src>
import jax
import jax.numpy as jnp
from jax.experimental import pallas as pl
from jax.experimental.pallas import tpu as pltpu


def _conv_bn_relu_kernel(w_ref, shift_ref, x_ref, o_ref):
    # w_ref:     (C_out, C_in)  BN-scale-folded pointwise conv weight
    # shift_ref: (C_out, 1)     folded conv-bias / BN shift (f32)
    # x_ref:     (C_in, TL)     one batch element, TL spatial positions (lanes)
    # o_ref:     (C_out, TL)
    x = x_ref[...]
    if x.dtype != w_ref.dtype:
        x = x.astype(w_ref.dtype)      # cast on the VMEM tile, not in HBM
    y = jnp.dot(w_ref[...], x, preferred_element_type=jnp.float32)
    y = y + shift_ref[...]             # broadcast over the lane axis
    o_ref[...] = jnp.maximum(y, 0.0).astype(o_ref.dtype)


def _vmem_budget():
    """Generation-aware (budget, vmem_limit, max L-tile)."""
    try:
        cap = pltpu.get_tpu_info().vmem_capacity_bytes
    except Exception:
        cap = 64 * 1024 * 1024
    if cap >= 100 * 1024 * 1024:                     # v5e / v6e: 128 MiB VMEM
        return 88 * 1024 * 1024, 100 * 1024 * 1024, 4096
    return 40 * 1024 * 1024, 48 * 1024 * 1024, 2048  # v7x: 64 MiB VMEM


def conv_bn_relu_1d(x, weight, conv_bias, gamma, beta, running_mean,
                    running_var, eps=1e-5, *, tl_target=None,
                    compute_dtype=jnp.float32, out_dtype=None):
    """Conv1d(kernel_size=1, bias=True) -> BatchNorm1d(eval) -> ReLU.

    x: (B, C_in, L) in PyTorch NCL layout. Returns (B, C_out, L).
    compute_dtype: matmul-input dtype (bf16 recommended on v6e/v7x); the
        accumulation is always f32.  x is NOT cast in the wrapper.
    out_dtype: output dtype (default: x.dtype); use bf16 when chaining layers.
    """
    B, C_in, L = x.shape
    C_out = weight.shape[0]
    out_dtype = x.dtype if out_dtype is None else out_dtype

    # Fold eval-mode BN + conv bias into the (tiny) weight/shift:
    #   BN(Wx + b) = scale*(Wx) + ((b - mean)*scale + beta),
    #   scale = gamma / sqrt(var + eps)
    scale = gamma / jnp.sqrt(running_var + eps)                 # (C_out,)
    shift = (conv_bias - running_mean) * scale + beta           # (C_out,)
    w2d = (weight.reshape(C_out, C_in) * scale[:, None]).astype(compute_dtype)
    shift2d = shift.reshape(C_out, 1).astype(jnp.float32)

    budget, vmem_limit, tl_cap = _vmem_budget()
    if tl_target is not None:
        tl_cap = tl_target

    x_bytes = jnp.dtype(x.dtype).itemsize
    o_bytes = jnp.dtype(out_dtype).itemsize
    w_bytes = jnp.dtype(compute_dtype).itemsize
    small_channels = (C_in <= 64 and C_out <= 64)
    io_bufs = 3 if small_channels else 2   # deeper buffering hides DMA latency

    def step_bytes(t):
        io = io_bufs * t * (C_in * x_bytes + C_out * o_bytes)
        wt = 2 * (C_in * C_out * w_bytes + C_out * 4)
        return io + wt

    # ---- L-tile selection: no HBM padding; boundary blocks are masked. ----
    if L <= tl_cap and step_bytes(L) <= budget:
        tl = L                                      # one full-L tile per batch
    else:
        L128 = ((L + 127) // 128) * 128
        cands = [d for d in range(128, min(tl_cap, L128) + 1, 128)
                 if L128 % d == 0]                  # waste <= 127 lanes
        cands = cands or [128]
        fits = [c for c in cands if step_bytes(c) <= budget]
        tl = max(fits) if fits else min(cands)

    num_l = pl.cdiv(L, tl)
    # v7x has 2 TensorCores: make sure a single-batch call still has >= 2
    # parallel grid steps (negligible cost on 1-TC chips).
    if B == 1 and num_l == 1 and L >= 256:
        tl = ((((L + 1) // 2) + 127) // 128) * 128
        num_l = pl.cdiv(L, tl)

    grid = (B, num_l)

    cost = pl.CostEstimate(
        flops=2 * B * L * C_in * C_out,
        transcendentals=0,
        bytes_accessed=(B * C_in * L * x_bytes + C_in * C_out * w_bytes
                        + C_out * 4 + B * C_out * L * o_bytes),
    )

    def run(use_pipeline_mode):
        if use_pipeline_mode:
            # Weight/shift block index never changes -> single buffer.
            w_kw = dict(pipeline_mode=pl.Buffered(1))
            io_kw = (dict(pipeline_mode=pl.Buffered(io_bufs))
                     if io_bufs != 2 else {})
        else:
            w_kw, io_kw = {}, {}
        in_specs = [
            pl.BlockSpec((C_out, C_in), lambda b, l: (0, 0), **w_kw),
            pl.BlockSpec((C_out, 1), lambda b, l: (0, 0), **w_kw),
            pl.BlockSpec((None, C_in, tl), lambda b, l: (b, 0, l), **io_kw),
        ]
        out_specs = pl.BlockSpec((None, C_out, tl), lambda b, l: (b, 0, l),
                                 **io_kw)
        return pl.pallas_call(
            _conv_bn_relu_kernel,
            out_shape=jax.ShapeDtypeStruct((B, C_out, L), out_dtype),
            grid_spec=pltpu.PrefetchScalarGridSpec(
                num_scalar_prefetch=0,
                grid=grid,
                in_specs=in_specs,
                out_specs=out_specs,
            ),
            compiler_params=pltpu.CompilerParams(
                dimension_semantics=("parallel", "parallel"),
                vmem_limit_bytes=vmem_limit,
            ),
            cost_estimate=cost,
        )(w2d, shift2d, x)

    try:
        return run(True)
    except Exception:
        # pipeline_mode/Buffered not available on this jax: fall back to the
        # previously-validated default double-buffered configuration.
        return run(False)


def _reference(x, weight, conv_bias, gamma, beta, mean, var, eps=1e-5):
    # Plain-JAX reference of Conv1d(k=1)+BN(eval)+ReLU for verification.
    w2d = weight.reshape(weight.shape[0], weight.shape[1])      # (C_out, C_in)
    y = jnp.einsum('bcl,oc->bol', x, w2d) + conv_bias[None, :, None]
    y = (y - mean[None, :, None]) / jnp.sqrt(var[None, :, None] + eps)
    y = y * gamma[None, :, None] + beta[None, :, None]
    return jnp.maximum(y, 0.0)


if __name__ == "__main__":
    # TODO(synk): only activation='relu' (the module default) and
    # kernel_size=1 (the module default) are implemented.
    B, C_in, C_out = 2, 4, 8
    key = jax.random.PRNGKey(0)
    kx, kw, kb, kg, kbeta, km, kv, kx2 = jax.random.split(key, 8)

    # Conv1d weight (C_out, C_in, kernel_size=1), bias (C_out,)
    weight = jax.random.normal(kw, (C_out, C_in, 1), dtype=jnp.float32) * 0.5
    conv_bias = jax.random.normal(kb, (C_out,), dtype=jnp.float32) * 0.1
    # BatchNorm1d params / running stats (eval-mode semantics)
    gamma = 1.0 + 0.1 * jax.random.normal(kg, (C_out,), dtype=jnp.float32)
    beta = 0.1 * jax.random.normal(kbeta, (C_out,), dtype=jnp.float32)
    running_mean = 0.1 * jax.random.normal(km, (C_out,), dtype=jnp.float32)
    running_var = jnp.abs(1.0 + 0.1 * jax.random.normal(kv, (C_out,),
                                                        dtype=jnp.float32))

    # 1) Small shape: single full-L tile per batch element.
    L = 16
    x = jax.random.normal(kx, (B, C_in, L), dtype=jnp.float32)
    out = jax.block_until_ready(conv_bn_relu_1d(
        x, weight, conv_bias, gamma, beta, running_mean, running_var))
    ref = _reference(x, weight, conv_bias, gamma, beta,
                     running_mean, running_var)
    assert out.shape == (B, C_out, L)
    assert jnp.allclose(out, ref, atol=1e-4, rtol=1e-4)

    # 2) Tiled path with a masked boundary block (no HBM pad / slice passes).
    L2 = 300
    x2 = jax.random.normal(kx2, (B, C_in, L2), dtype=jnp.float32)
    out2 = jax.block_until_ready(conv_bn_relu_1d(
        x2, weight, conv_bias, gamma, beta, running_mean, running_var,
        tl_target=128))
    ref2 = _reference(x2, weight, conv_bias, gamma, beta,
                      running_mean, running_var)
    assert out2.shape == (B, C_out, L2)
    assert jnp.allclose(out2, ref2, atol=1e-4, rtol=1e-4)

    # 3) bf16 matmul inputs + bf16 output (f32 accumulate); cast is in-kernel.
    out3 = jax.block_until_ready(conv_bn_relu_1d(
        x2, weight, conv_bias, gamma, beta, running_mean, running_var,
        tl_target=128, compute_dtype=jnp.bfloat16, out_dtype=jnp.bfloat16))
    assert out3.shape == (B, C_out, L2) and out3.dtype == jnp.bfloat16
    assert jnp.allclose(out3.astype(jnp.float32), ref2, atol=5e-2, rtol=5e-2)

    print("KERNEL_OK")
</pallas_src>

<mosaic_0001>
module attributes {stable_mosaic.version = 11 : i64} {
  func.func @_conv_bn_relu_kernel(%arg0: i32, %arg1: i32, %arg2: memref<8x4xf32, #tpu.memory_space<vmem>>, %arg3: memref<8x1xf32, #tpu.memory_space<vmem>>, %arg4: memref<1x4x16xf32, #tpu.memory_space<vmem>>, %arg5: memref<1x8x16xf32, #tpu.memory_space<vmem>>) attributes {dimension_semantics = [#tpu.dimension_semantics<parallel>, #tpu.dimension_semantics<parallel>], iteration_bounds = array<i64: 2, 1>, scalar_prefetch = 0 : i64, scratch_operands = 0 : i64, tpu.core_type = #tpu.core_type<tc>, window_params = [{pipeline_mode = #tpu.pipeline_mode<synchronous>, transform_indices = @transform_0, window_bounds = array<i64: 8, 4>}, {pipeline_mode = #tpu.pipeline_mode<synchronous>, transform_indices = @transform_1, window_bounds = array<i64: 8, 1>}, {transform_indices = @transform_2, window_bounds = array<i64: 1, 4, 16>}, {transform_indices = @transform_3, window_bounds = array<i64: 1, 8, 16>}]} {
    %c0 = arith.constant 0 : index
    %c0_0 = arith.constant 0 : index
    %c0_1 = arith.constant 0 : index
    %0 = vector.load %arg4[%c0, %c0_0, %c0_1] : memref<1x4x16xf32, #tpu.memory_space<vmem>>, vector<1x4x16xf32>
    %1 = vector.shape_cast %0 : vector<1x4x16xf32> to vector<4x16xf32>
    %c0_2 = arith.constant 0 : index
    %c0_3 = arith.constant 0 : index
    %2 = vector.load %arg2[%c0_2, %c0_3] : memref<8x4xf32, #tpu.memory_space<vmem>>, vector<8x4xf32>
    %cst = arith.constant dense<0.000000e+00> : vector<8x16xf32>
    %3 = tpu.matmul %2, %1, %cst {dimension_numbers = #tpu.dot_dimension_numbers<[1], [0], [0], [1], [0, 0, 1, 1], [], []>} : vector<8x4xf32>, vector<4x16xf32>, vector<8x16xf32> -> vector<8x16xf32>
    %c0_4 = arith.constant 0 : index
    %c0_5 = arith.constant 0 : index
    %4 = vector.load %arg3[%c0_4, %c0_5] : memref<8x1xf32, #tpu.memory_space<vmem>>, vector<8x1xf32>
    %5 = vector.broadcast %4 : vector<8x1xf32> to vector<8x16xf32>
    %6 = arith.addf %3, %5 : vector<8x16xf32>
    %cst_6 = arith.constant 0.000000e+00 : f32
    %7 = vector.broadcast %cst_6 : f32 to vector<8x16xf32>
    %8 = arith.maximumf %6, %7 : vector<8x16xf32>
    %c0_7 = arith.constant 0 : index
    %c0_8 = arith.constant 0 : index
    %c0_9 = arith.constant 0 : index
    %9 = vector.load %arg5[%c0_7, %c0_8, %c0_9] : memref<1x8x16xf32, #tpu.memory_space<vmem>>, vector<1x8x16xf32>
    %10 = vector.shape_cast %9 : vector<1x8x16xf32> to vector<8x16xf32>
    %11 = vector.shape_cast %8 : vector<8x16xf32> to vector<1x8x16xf32>
    tpu.vector_store %arg5[%c0_7, %c0_8, %c0_9], %11 {strides = array<i32>} : memref<1x8x16xf32, #tpu.memory_space<vmem>>, vector<1x8x16xf32>,
    return
  }
  func.func @transform_0(%arg0: i32, %arg1: i32) -> (i32, i32) {
    %c0_i32 = arith.constant 0 : i32
    %c0_i32_0 = arith.constant 0 : i32
    %c0_i32_1 = arith.constant 0 : i32
    return %c0_i32, %c0_i32_0 : i32, i32
  }
  func.func @transform_1(%arg0: i32, %arg1: i32) -> (i32, i32) {
    %c0_i32 = arith.constant 0 : i32
    %c0_i32_0 = arith.constant 0 : i32
    %c0_i32_1 = arith.constant 0 : i32
    return %c0_i32, %c0_i32_0 : i32, i32
  }
  func.func @transform_2(%arg0: i32, %arg1: i32) -> (i32, i32, i32) {
    %c0_i32 = arith.constant 0 : i32
    %c0_i32_0 = arith.constant 0 : i32
    return %arg0, %c0_i32, %arg1 : i32, i32, i32
  }
  func.func @transform_3(%arg0: i32, %arg1: i32) -> (i32, i32, i32) {
    %c0_i32 = arith.constant 0 : i32
    %c0_i32_0 = arith.constant 0 : i32
    return %arg0, %c0_i32, %arg1 : i32, i32, i32
  }
}

</mosaic_0001>

<llo_original>
// kernel: tpu_custom_call.1
$region0: #{tpu_custom_call.1}
  #allocation0 [shape = 'u32[]', space=smem, size = 0x4, offset = 0x4, fixed_abs, tag = 'smem constant byte address 0x4 - core index']
  #allocation1 [shape = 'u32[144,128]{1,0:T(1,128)}', space=vmem, size = 0x12000, scoped, tag = 'internal scratch']
  %s0 = inlined_call_operand.vmem [shape: f32[8,4], index: 0, kind: input, shape index: {}]
  %s1 = inlined_call_operand.vmem [shape: f32[8,1], index: 1, kind: input, shape index: {}]
  %s2 = inlined_call_operand.vmem [shape: f32[2,4,16], index: 2, kind: input, shape index: {}]
  %s3 = inlined_call_operand.hbm [shape: f32[2,8,16], index: 3, kind: output, shape index: {}]
  %s4 = sld [smem:[#allocation0]]
  $region45: #{tpu_custom_call.1} parent=0
    _
  %s6 = ssub.s32 1, %s4
  %s7 = scalar_select 0, %s6, %s4
  $region1: #{tpu_custom_call.1} parent=0
    #allocation2 [shape = 'u8[8192]{0}', space=vmem, size = 0x2000, scoped, tag = 'output window, operand 0']
    #allocation3 [shape = 's32[2]{0}', space=sflag, size = 0x8, scoped, tag = 'scoped memory for tpu_custom_call.1']
    %8 = vsyncpa [#allocation3], 0
    %s9 = scalar_lea.sflag [#allocation3], 1
    %10 = vsyncpa %s9, 0
    loop: start=0, step=1, limit=4
    $region2: #{tpu_custom_call.1} parent=1 // loop_pre_header
      _
    $region3: #{tpu_custom_call.1} parent=1 // loop_header
      %s12 = sphi 0, %s16
      %p13 = scmp.ge.s32.totalorder %s12, 4
      %s19 = sphi 0, %s31
      %s20 = sphi 0, %s27
      %s21 = sphi 0, %s19
      %s22 = sphi 0, %s20
      %s23 = sphi 0, %s21
      %s24 = sphi 0, %s22
      %s32 = sphi 0, %s32
      %s34 = sphi 0, %s32
      %s35 = sphi 0, %s34
      %s49 = sphi 0, %s35
      %s53 = sphi 0, %s53
      %s55 = sphi 0, %s53
      %s56 = sphi 0, %s55
      %s70 = sphi 0, %s56
      %s78 = sphi 0, %s80
      %s81 = sphi 0, %s78
      %s82 = sphi 0, %s81
      %s98 = sphi 0, %s82
      %s106 = sphi 0, %s108
      %s109 = sphi 0, %s106
      %s110 = sphi 0, %s109
      %s126 = sphi 0, %s110
    $region4: #{tpu_custom_call.1} parent=1 // loop_header_branch
      %15 = sbr.rel (%p13) target = $region8
    $region5: #{tpu_custom_call.1} parent=1 // loop_body
      %s17 = ssub.s32 %s12, 1
      %s18 = ssub.s32 %s12, 2
      %s25 = sadd.s32 1, %s20
      %p26 = scmp.ge.s32.totalorder %s25, 1
      %s27 = scalar_select %p26, 0, %s25
      %s28 = sadd.s32 1, %s19
      %s29 = scalar_select %p26, %s28, %s19
      %p30 = scmp.ge.s32.totalorder %s29, 2
      %s31 = scalar_select %p30, 0, %s29
      %s33 = sadd.s32 %s32, 1
      %p36 = scmp.eq.s32.totalorder %s12, 1
      %p37 = scmp.ne.s32.totalorder %s32, %s34
      %p38 = scmp.eq.s32.totalorder %s12, 0
      %p39 = por %p37, %p38
      %p40 = scmp.ne.s32.totalorder %s32, %s34
      %p41 = scmp.eq.s32.totalorder %s17, 1
      %p42 = por %p40, %p41
      %p43 = scmp.ne.s32.totalorder %s34, %s35
      %p44 = scmp.eq.s32.totalorder %s17, 0
      %p45 = por %p43, %p44
      %p46 = scmp.ne.s32.totalorder %s34, %s35
      %p47 = scmp.eq.s32.totalorder %s18, 1
      %p48 = por %p46, %p47
      %p50 = scmp.ne.s32.totalorder %s35, %s49
      %p51 = scmp.eq.s32.totalorder %s18, 0
      %p52 = por %p50, %p51
      %s54 = sadd.s32 %s53, 1
      %p57 = scmp.eq.s32.totalorder %s12, 1
      %p58 = scmp.ne.s32.totalorder %s53, %s55
      %p59 = scmp.eq.s32.totalorder %s12, 0
      %p60 = por %p58, %p59
      %p61 = scmp.ne.s32.totalorder %s53, %s55
      %p62 = scmp.eq.s32.totalorder %s17, 1
      %p63 = por %p61, %p62
      %p64 = scmp.ne.s32.totalorder %s55, %s56
      %p65 = scmp.eq.s32.totalorder %s17, 0
      %p66 = por %p64, %p65
      %p67 = scmp.ne.s32.totalorder %s55, %s56
      %p68 = scmp.eq.s32.totalorder %s18, 1
      %p69 = por %p67, %p68
      %p71 = scmp.ne.s32.totalorder %s56, %s70
      %p72 = scmp.eq.s32.totalorder %s18, 0
      %p73 = por %p71, %p72
      %s74 = ssub.s32 %s19, %s31
      %s75 = ssub.s32 %s20, %s27
      %s76 = sor.u32 %s74, %s75
      %p77 = scmp.eq.s32.totalorder %s76, 0
      %s79 = sadd.s32 %s78, 1
      %s80 = scalar_select %p77, %s78, %s79
      %p83 = pneg %p77
      %p84 = scmp.eq.s32.totalorder %s12, 1
      %p85 = por %p83, %p84
      %p86 = scmp.ne.s32.totalorder %s78, %s81
      %p87 = scmp.eq.s32.totalorder %s12, 0
      %p88 = por %p86, %p87
      %p89 = scmp.ne.s32.totalorder %s78, %s81
      %p90 = scmp.eq.s32.totalorder %s17, 1
      %p91 = por %p89, %p90
      %p92 = scmp.ne.s32.totalorder %s81, %s82
      %p93 = scmp.eq.s32.totalorder %s17, 0
      %p94 = por %p92, %p93
      %p95 = scmp.ne.s32.totalorder %s81, %s82
      %p96 = scmp.eq.s32.totalorder %s18, 1
      %p97 = por %p95, %p96
      %p99 = scmp.ne.s32.totalorder %s82, %s98
      %p100 = scmp.eq.s32.totalorder %s18, 0
      %p101 = por %p99, %p100
      %s102 = ssub.s32 %s19, %s31
      %s103 = ssub.s32 %s20, %s27
      %s104 = sor.u32 %s102, %s103
      %p105 = scmp.eq.s32.totalorder %s104, 0
      %s107 = sadd.s32 %s106, 1
      %s108 = scalar_select %p105, %s106, %s107
      %p111 = pneg %p105
      %p112 = scmp.eq.s32.totalorder %s12, 1
      %p113 = por %p111, %p112
      %p114 = scmp.ne.s32.totalorder %s106, %s109
      %p115 = scmp.eq.s32.totalorder %s12, 0
      %p116 = por %p114, %p115
      %p117 = scmp.ne.s32.totalorder %s106, %s109
      %p118 = scmp.eq.s32.totalorder %s17, 1
      %p119 = por %p117, %p118
      %p120 = scmp.ne.s32.totalorder %s109, %s110
      %p121 = scmp.eq.s32.totalorder %s17, 0
      %p122 = por %p120, %p121
      %p123 = scmp.ne.s32.totalorder %s109, %s110
      %p124 = scmp.eq.s32.totalorder %s18, 1
      %p125 = por %p123, %p124
      %p127 = scmp.ne.s32.totalorder %s110, %s126
      %p128 = scmp.eq.s32.totalorder %s18, 0
      %p129 = por %p127, %p128
      %p130 = scmp.le.s32.totalorder 1, %s12
      %p131 = scmp.lt.s32.totalorder %s12, 3
      %p132 = pnand %p130, %p131
      %p133 = pneg %p132
      // Predicated region
      $region9: #{tpu_custom_call.1} parent=5 // pred_check
        _
      $region10: #{tpu_custom_call.1} parent=5 // pred_check_branch
        %135 = sbr.rel (%p132) target = $region12
      $region11: #{tpu_custom_call.1} parent=5 // pred_region
        %s136 = ssub.s32 %s12, 1
        // Predicated region
        $region13: #{tpu_custom_call.1} parent=11 // pred_check
          %p137 = pneg %p45
        $region14: #{tpu_custom_call.1} parent=11 // pred_check_branch
          %139 = sbr.rel (%p137) target = $region16
        $region15: #{tpu_custom_call.1} parent=11 // pred_region
          _
        $region16: #{tpu_custom_call.1} parent=11 // pred_fallthru
          _
        // Predicated region
        $region17: #{tpu_custom_call.1} parent=11 // pred_check
          %p140 = pneg %p66
        $region18: #{tpu_custom_call.1} parent=11 // pred_check_branch
          %142 = sbr.rel (%p140) target = $region20
        $region19: #{tpu_custom_call.1} parent=11 // pred_region
          _
        $region20: #{tpu_custom_call.1} parent=11 // pred_fallthru
          _
      $region12: #{tpu_custom_call.1} parent=5 // pred_fallthru
        _
      %p143 = scmp.lt.s32.totalorder %s12, 2
      // Predicated region
      $region21: #{tpu_custom_call.1} parent=5 // pred_check
        %p144 = pneg %p143
      $region22: #{tpu_custom_call.1} parent=5 // pred_check_branch
        %146 = sbr.rel (%p144) target = $region24
      $region23: #{tpu_custom_call.1} parent=5 // pred_region
        // Predicated region
        $region25: #{tpu_custom_call.1} parent=23 // pred_check
          %p147 = pneg %p88
        $region26: #{tpu_custom_call.1} parent=23 // pred_check_branch
          %149 = sbr.rel (%p147) target = $region28
        $region27: #{tpu_custom_call.1} parent=23 // pred_region
          %p150 = scmp.lt.s32.totalorder %s19, 1
          %s151 = scalar_select %p150, %s19, 1
          %p152 = scmp.lt.s32.totalorder %s20, 0
          %s153 = scalar_select %p152, %s20, 0
          %s154 = sadd.s32 %s153, %s151
          %s155 = smul.addr %s154, 4
          %s156 = scalar_lea.vmem %s2, %s155
        $region28: #{tpu_custom_call.1} parent=23 // pred_fallthru
          _
      $region24: #{tpu_custom_call.1} parent=5 // pred_fallthru
        _
      %p157 = scmp.le.s32.totalorder 1, %s12
      %p158 = scmp.lt.s32.totalorder %s12, 3
      %p159 = pnand %p157, %p158
      %p160 = pneg %p159
      // Predicated region
      $region29: #{tpu_custom_call.1} parent=5 // pred_check
        _
      $region30: #{tpu_custom_call.1} parent=5 // pred_check_branch
        %162 = sbr.rel (%p159) target = $region32
      $region31: #{tpu_custom_call.1} parent=5 // pred_region
        %s163 = ssub.s32 %s12, 1
        %p164 = pneg %p45
        %p165 = pneg %p42
        %p166 = pneg %p66
        %p167 = pneg %p63
        %p168 = scmp.lt.s32.totalorder %s21, 1
        %s169 = scalar_select %p168, %s21, 1
        %p170 = scmp.lt.s32.totalorder %s22, 0
        %s171 = scalar_select %p170, %s22, 0
        %s172 = sadd.s32 %s171, %s169
        %s173 = smul.addr %s172, 4
        %s174 = scalar_lea.vmem %s2, %s173
        %p175 = pneg %p94
        %p176 = pneg %p91
        %p177 = pneg %p122
        %p178 = pneg %p119
        %s179 = sand.u32 %s109, 1
        %s180 = scalar_lea.sflag [#allocation3], %s179
        %s181 = sand.u32 %s109, 1
        %s182 = smul.addr %s181, 8
        %s183 = scalar_lea.vmem [#allocation2], %s182
        %p184 = scmp.lt.s32.totalorder %s21, 1
        %s185 = scalar_select %p184, %s21, 1
        %p186 = scmp.lt.s32.totalorder %s22, 0
        %s187 = scalar_select %p186, %s22, 0
        %s188 = sadd.s32 %s187, %s185
        %s189 = smul.addr %s188, 4
        %s190 = scalar_lea.vmem %s2, %s189
        %v191 = vld [vmem:[%s190] sm:$0xf]
        %v192 = vld [vmem:[%s0] sm:$0xff]
        %v193 = vld [vmem:[%s1] sm:$0xff]
        %195 = vset.pattern.permute.xlu0 0
        %196 = vperm.xlu0 %195, %v193
        %v197 = vpop.permute.xlu0 %196
        %vm199 = vcmask 31744
        %v201 = vsel %vm199, %v192, 0
        %vm203 = vcmask 1043456
        %v205 = vsel %vm203, %v191, 0
        %207 = vmatprep.subr.mxu0 0.0
        %208 = vmatpush1.msra.mxu0 0.0
        %209 = vmatprep.subr.mxu0 0.0
        %210 = vmatpush1.msra.mxu0 0.0
        %211 = vmatprep.subr.mxu0 0.0
        %212 = vmatpush1.msra.mxu0 0.0
        %213 = vmatprep.subr.mxu0 0.0
        %214 = vmatpush1.msra.mxu0 0.0
        %215 = vmatprep.subr.mxu0 0.0
        %216 = vmatpush1.msra.mxu0 0.0
        %217 = vmatprep.subr.mxu0 0.0
        %218 = vmatpush1.msra.mxu0 0.0
        %219 = vmatprep.subr.mxu0 0.0
        %220 = vmatpush1.msra.mxu0 0.0
        %221 = vmatprep.subr.mxu0 0.0
        %222 = vmatpush1.msra.mxu0 0.0
        %223 = vmatprep.subr.mxu0 0.0
        %224 = vmatpush1.msra.mxu0 0.0
        %225 = vmatprep.subr.mxu0 0.0
        %226 = vmatpush1.msra.mxu0 0.0
        %227 = vmatprep.subr.mxu0 0.0
        %228 = vmatpush1.msra.mxu0 0.0
        %229 = vmatprep.subr.mxu0 0.0
        %230 = vmatpush1.msra.mxu0 0.0
        %231 = vmatprep.subr.mxu0 0.0
        %232 = vmatpush1.msra.mxu0 0.0
        %233 = vmatprep.subr.mxu0 0.0
        %234 = vmatpush1.msra.mxu0 0.0
        %235 = vmatprep.subr.mxu0 0.0
        %236 = vmatpush1.msra.mxu0 0.0
        %237 = vmatprep.subr.mxu0 0.0
        %238 = vmatpush1.msra.mxu0 %v205
        %239 = vmatprep.subr.mxu0 0.0
        %240 = vmatpush2.msra.mxu0 0.0
        %241 = vmatprep.subr.mxu0 0.0
        %242 = vmatpush2.msra.mxu0 0.0
        %243 = vmatprep.subr.mxu0 0.0
        %244 = vmatpush2.msra.mxu0 0.0
        %245 = vmatprep.subr.mxu0 0.0
        %246 = vmatpush2.msra.mxu0 0.0
        %247 = vmatprep.subr.mxu0 0.0
        %248 = vmatpush2.msra.mxu0 0.0
        %249 = vmatprep.subr.mxu0 0.0
        %250 = vmatpush2.msra.mxu0 0.0
        %251 = vmatprep.subr.mxu0 0.0
        %252 = vmatpush2.msra.mxu0 0.0
        %253 = vmatprep.subr.mxu0 0.0
        %254 = vmatpush2.msra.mxu0 0.0
        %255 = vmatprep.subr.mxu0 0.0
        %256 = vmatpush2.msra.mxu0 0.0
        %257 = vmatprep.subr.mxu0 0.0
        %258 = vmatpush2.msra.mxu0 0.0
        %259 = vmatprep.subr.mxu0 0.0
        %260 = vmatpush2.msra.mxu0 0.0
        %261 = vmatprep.subr.mxu0 0.0
        %262 = vmatpush2.msra.mxu0 0.0
        %263 = vmatprep.subr.mxu0 0.0
        %264 = vmatpush2.msra.mxu0 0.0
        %265 = vmatprep.subr.mxu0 0.0
        %266 = vmatpush2.msra.mxu0 0.0
        %267 = vmatprep.subr.mxu0 0.0
        %268 = vmatpush2.msra.mxu0 0.0
        %269 = vmatprep.subr.mxu0 0.0
        %270 = vmatpush2.msra.mxu0 0.0
        %271 = vmatprep.mubr.f32.mxu0 0.0
        %272 = vmatmul.mubr.f32.gmra.mxu0 %v201
        %v273 = vpop.f32.mrf.mxu0
        %v274 = vadd.f32 %v197, %v273
        %v275 = vpop.f32.mrf.mxu0
        %276 = vdwg.mxu0
        %v277 = vmax.f32 %v274, 0.0
        %vm278 = vcmask 130048
        %279 = vst.msk [vmem:[%s183] sm:$0xff] %vm278, %v277
        %s280 = sand.u32 %s109, 1
        %s281 = scalar_lea.sflag [#allocation3], %s280
        %s282 = sand.u32 %s109, 1
        %s283 = smul.addr %s282, 8
        %s284 = scalar_lea.vmem [#allocation2], %s283
        // Predicated region
        $region33: #{tpu_custom_call.1} parent=31 // pred_check
          %p285 = pneg %p119
        $region34: #{tpu_custom_call.1} parent=31 // pred_check_branch
          %287 = sbr.rel (%p285) target = $region36
        $region35: #{tpu_custom_call.1} parent=31 // pred_region
          %s289 = ssub.s32 128, 128
          %290 = vsyncadd %s281, %s289
          %s291 = sadd.s32 %s22, %s21
          %s292 = smul.addr %s291, 128
          %s293 = scalar_lea.hbm %s3, %s292
          %s295 = sshll.u32 %s284, 4
          %s296 = int_to_ptr.vmem [resolvable:$true] %s295
          %298 = dma.vmem_to_hbm [thread:$0]  %s296, 128, %s293, %s281
        $region36: #{tpu_custom_call.1} parent=31 // pred_fallthru
          _
      $region32: #{tpu_custom_call.1} parent=5 // pred_fallthru
        _
      %p299 = scmp.le.s32.totalorder 2, %s12
      // Predicated region
      $region37: #{tpu_custom_call.1} parent=5 // pred_check
        %p300 = pneg %p299
      $region38: #{tpu_custom_call.1} parent=5 // pred_check_branch
        %302 = sbr.rel (%p300) target = $region40
      $region39: #{tpu_custom_call.1} parent=5 // pred_region
        %s303 = ssub.s32 %s12, 2
        // Predicated region
        $region41: #{tpu_custom_call.1} parent=39 // pred_check
          %p304 = pneg %p125
        $region42: #{tpu_custom_call.1} parent=39 // pred_check_branch
          %306 = sbr.rel (%p304) target = $region44
        $region43: #{tpu_custom_call.1} parent=39 // pred_region
          %s307 = sand.u32 %s110, 1
          %s308 = scalar_lea.sflag [#allocation3], %s307
          %s309 = sand.u32 %s110, 1
          %s310 = smul.addr %s309, 8
          %s311 = scalar_lea.vmem [#allocation2], %s310
          %312 = dma.done %s308, 128
        $region44: #{tpu_custom_call.1} parent=39 // pred_fallthru
          _
      $region40: #{tpu_custom_call.1} parent=5 // pred_fallthru
        _
    $region6: #{tpu_custom_call.1} parent=1 // loop_footer
      %s16 = sadd.s32 1, %s12
    $region7: #{tpu_custom_call.1} parent=1 // loop_footer_branch
      %11 = sbr.rel target = $region3
    $region8: #{tpu_custom_call.1} parent=1 // loop_exit
      _
    %313 = vsyncpa [#allocation3], 1
    %s314 = scalar_lea.sflag [#allocation3], 1
    %315 = vsyncpa %s314, 1

</llo_original>
